<compile_context>
chip_gen: v7x
topology: tpu7x:2x2x1
jax: 0.10.0
libtpu: 0.0.40
codegen_flags: <defaults>
</compile_context>

<pallas_src>
import math

import jax
import jax.numpy as jnp
from jax.experimental import pallas as pl
from jax.experimental.pallas import tpu as pltpu


# ----------------------------------------------------------------------------
# Kernels
# ----------------------------------------------------------------------------
def _ffn_kernel_accum_out(x_ref, w1_ref, w2_ref, xw3_ref, o_ref):
    """f32-output variant: accumulate directly into the resident output tile.

    Grid = (m, h); m indexes row tiles ("parallel"), h indexes the hidden-dim
    reduction ("arbitrary", trailing).  The output block index is constant in
    h, so the (tm, D) f32 output tile stays resident across the reduction.
    """
    h = pl.program_id(1)

    @pl.when(h == 0)
    def _():
        # Seed with the precomputed x @ W3 branch.
        o_ref[...] = xw3_ref[...].astype(jnp.float32)

    t = jnp.dot(x_ref[...], w1_ref[...], preferred_element_type=jnp.float32)
    silu = t * jax.nn.sigmoid(t)  # f32 elementwise/EUP (safe on v5e, no bf16 VPU)
    o_ref[...] += jnp.dot(silu.astype(w2_ref.dtype), w2_ref[...],
                          preferred_element_type=jnp.float32)


def _ffn_kernel_scratch_acc(x_ref, w1_ref, w2_ref, xw3_ref, o_ref, acc_ref):
    """Generic-output variant: f32 scratch accumulator, cast on last h step."""
    h = pl.program_id(1)

    @pl.when(h == 0)
    def _():
        acc_ref[...] = xw3_ref[...].astype(jnp.float32)

    t = jnp.dot(x_ref[...], w1_ref[...], preferred_element_type=jnp.float32)
    silu = t * jax.nn.sigmoid(t)
    acc_ref[...] += jnp.dot(silu.astype(w2_ref.dtype), w2_ref[...],
                            preferred_element_type=jnp.float32)

    @pl.when(h == pl.num_programs(1) - 1)
    def _():
        o_ref[...] = acc_ref[...].astype(o_ref.dtype)


# ----------------------------------------------------------------------------
# Tile / VMEM heuristics
# ----------------------------------------------------------------------------
def _largest_divisor_tile(n, candidates):
    """Largest candidate that evenly divides n, else the full extent."""
    for c in candidates:
        if c <= n and n % c == 0:
            return c
    return n


def _next_smaller_tile(v, candidates, n):
    """Next smaller candidate that divides n, else v unchanged."""
    for c in candidates:
        if c < v and c <= n and n % c == 0:
            return c
    return v


def _device_kind():
    try:
        return jax.devices()[0].device_kind.lower()
    except Exception:  # pragma: no cover
        return ""


def _vmem_capacity_bytes():
    """Physical per-core VMEM, generation aware with conservative fallback."""
    try:
        cap = getattr(pltpu.get_tpu_info(), "vmem_capacity_bytes", None)
        if cap:
            return int(cap)
    except Exception:
        pass
    kind = _device_kind()
    if "v5" in kind or "v6" in kind:
        return 128 * 1024 * 1024
    return 64 * 1024 * 1024  # v7x (and safe default elsewhere)


# ----------------------------------------------------------------------------
# Wrapper
# ----------------------------------------------------------------------------
def feed_forward(x, w1, w2, w3, *, tm=None, th=None, compute_dtype=jnp.bfloat16):
    """Fused Llama3 FFN forward: w2(silu(w1 x)) + w3 x.

    x:  [B, S, D]
    w1: [D, H]   (pre-transposed, i.e. [in, out])
    w2: [H, D]
    w3: [D, D]
    compute_dtype: dtype fed to the MXU (default bf16); accumulation stays f32
                   and the output keeps x's dtype.
    """
    B, S, D = x.shape
    H = w1.shape[1]
    assert w1.shape == (D, H) and w2.shape == (H, D) and w3.shape == (D, D)

    out_dtype = x.dtype
    f32_out = jnp.dtype(out_dtype) == jnp.dtype(jnp.float32)
    M = B * S
    x2d = x.reshape(M, D)

    if compute_dtype is None:
        compute_dtype = jnp.bfloat16
    xc = x2d.astype(compute_dtype)
    w1c = w1.astype(compute_dtype)
    w2c = w2.astype(compute_dtype)

    # x @ W3 branch: plain XLA matmul outside the kernel (smallest GEMM, ~D/2H
    # of total FLOPs); its result seeds the kernel accumulator.  Keeps the
    # (D, D) weight out of VMEM entirely.
    xw3_dtype = jnp.float32 if f32_out else compute_dtype
    xw3 = jnp.dot(xc, w3.astype(compute_dtype),
                  preferred_element_type=jnp.float32).astype(xw3_dtype)

    cd_b = jnp.dtype(compute_dtype).itemsize
    xw3_b = jnp.dtype(xw3_dtype).itemsize
    out_b = jnp.dtype(out_dtype).itemsize

    vmem_cap = _vmem_capacity_bytes()
    vmem_budget = int(0.85 * vmem_cap)

    # Row-tile candidates: large tm amortizes per-m-tile weight re-streaming
    # (needed to be compute-bound on v6e/v7x); v5e is compute-bound already at
    # 256-512 and prefers smaller live temps.  bf16 inputs keep tm >= 16 so
    # sublane packing stays dense and stores unmasked.
    kind = _device_kind()
    tm_max = 512 if "v5" in kind else 1024
    min_tm = 16 if cd_b < 4 else 8
    tm_cands = tuple(c for c in (1024, 512, 256, 128, 64, 32, 16, 8)
                     if min_tm <= c <= tm_max)
    th_cands = (2048, 1024, 512, 256, 128)

    def footprint(tm_, th_, w_bufs):
        b = 2 * tm_ * D * cd_b          # x tile (double-buffered across m)
        b += w_bufs * D * th_ * cd_b    # w1 tile (streamed along h)
        b += w_bufs * th_ * D * cd_b    # w2 tile (streamed along h)
        b += 2 * tm_ * D * xw3_b        # xw3 seed tile
        b += 2 * tm_ * D * out_b        # output tile
        if not f32_out:
            b += tm_ * D * 4            # resident f32 accumulator scratch
        b += 3 * tm_ * th_ * 4          # (tm, th) f32 temps: t, silu, bf16 cast
        return b

    tm_auto = tm is None
    th_auto = th is None
    if tm_auto:
        tm = _largest_divisor_tile(M, tm_cands)
    if th_auto:
        th = _largest_divisor_tile(H, th_cands)

    # Bound the (tm, th) live f32 intermediates (~<= 4 MiB).
    while th_auto and tm * th > (1 << 20):
        new_th = _next_smaller_tile(th, th_cands, H)
        if new_th == th:
            break
        th = new_th

    # Shrink auto tiles until the modelled footprint fits per-core VMEM.
    while footprint(tm, th, 2) > vmem_budget:
        if th_auto:
            new_th = _next_smaller_tile(th, th_cands, H)
            if new_th != th:
                th = new_th
                continue
        if tm_auto:
            new_tm = _next_smaller_tile(tm, tm_cands, M)
            if new_tm != tm:
                tm = new_tm
                continue
        break

    assert M % tm == 0 and H % th == 0, (M, tm, H, th)
    grid_m, grid_h = M // tm, H // th

    # Decode regime (single m-tile, pure weight streaming): deepen the w1/w2
    # pipelines to 3 buffers if VMEM headroom allows, to hide DMA latency
    # between h-steps.
    w_buffers = 2
    if grid_m == 1 and grid_h >= 3 and footprint(tm, th, 3) <= vmem_budget:
        w_buffers = 3

    def w_spec(shape, imap):
        if w_buffers == 2:
            return pl.BlockSpec(shape, imap)
        return pl.BlockSpec(shape, imap, pipeline_mode=pl.Buffered(w_buffers))

    need = footprint(tm, th, w_buffers)
    vmem_limit = int(min(max(int(need * 1.3), 32 * 1024 * 1024),
                         int(0.9 * vmem_cap)))

    # Truthful cost estimate: weights are re-streamed once per m-tile.
    cost = pl.CostEstimate(
        flops=4 * M * D * H,                 # w1 + w2 GEMMs (w3 done outside)
        transcendentals=M * H,               # sigmoid per hidden activation
        bytes_accessed=(grid_m * 2 * D * H * cd_b
                        + M * D * (cd_b + xw3_b + out_b)),
    )

    in_specs = [
        # x row tile: constant in h -> resident across the reduction.
        pl.BlockSpec((tm, D), lambda m, h: (m, 0)),
        # w1 column tile / w2 row tile stream along the H reduction.
        w_spec((D, th), lambda m, h: (0, h)),
        w_spec((th, D), lambda m, h: (h, 0)),
        # Precomputed x @ W3 seed: constant in h -> resident.
        pl.BlockSpec((tm, D), lambda m, h: (m, 0)),
    ]
    out_spec = pl.BlockSpec((tm, D), lambda m, h: (m, 0))

    if f32_out:
        kernel = _ffn_kernel_accum_out
        scratch = []
    else:
        kernel = _ffn_kernel_scratch_acc
        scratch = [pltpu.VMEM((tm, D), jnp.float32)]

    # TODO(synk): for v7x decode, sharding the H reduction across the two
    # TensorCores (instead of the M axis) would halve per-chip weight bytes;
    # needs an explicit core_map + cross-core combine.
    out2d = pl.pallas_call(
        kernel,
        out_shape=jax.ShapeDtypeStruct((M, D), out_dtype),
        grid_spec=pltpu.PrefetchScalarGridSpec(
            num_scalar_prefetch=0,
            grid=(grid_m, grid_h),
            in_specs=in_specs,
            out_specs=out_spec,
            scratch_shapes=scratch,
        ),
        compiler_params=pltpu.CompilerParams(
            dimension_semantics=("parallel", "arbitrary"),
            vmem_limit_bytes=vmem_limit,
        ),
        cost_estimate=cost,
    )(xc, w1c, w2c, xw3)

    return out2d.reshape(B, S, D)


def llama3_hidden_dim(dim, multiple_of, ffn_dim_multiplier=None):
    hidden_dim = 4 * dim
    hidden_dim = int(2 * hidden_dim / 3)
    if ffn_dim_multiplier is not None:
        hidden_dim = int(ffn_dim_multiplier * dim)
    return multiple_of * ((hidden_dim + multiple_of - 1) // multiple_of)


if __name__ == "__main__":
    # Small config consistent with the module.
    dim = 128
    multiple_of = 256
    ffn_dim_multiplier = None
    hidden = llama3_hidden_dim(dim, multiple_of, ffn_dim_multiplier)  # -> 512
    batch, seq = 2, 8

    key = jax.random.PRNGKey(0)
    kx, k1, k2, k3 = jax.random.split(key, 4)

    x = jax.random.normal(kx, (batch, seq, dim), dtype=jnp.float32)

    # Deterministic weight init (PyTorch Linear stores [out, in]; build that
    # then transpose to [in, out] for the kernel).
    def init_linear(k, fan_in, fan_out):
        bound = 1.0 / math.sqrt(fan_in)
        w_out_in = jax.random.uniform(k, (fan_out, fan_in), jnp.float32,
                                      minval=-bound, maxval=bound)
        return w_out_in.T  # [in, out]

    w1 = init_linear(k1, dim, hidden)    # [D, H]
    w2 = init_linear(k2, hidden, dim)    # [H, D]
    w3 = init_linear(k3, dim, dim)       # [D, D]

    # Pure-JAX references.
    h_ref = x @ w1
    ref = (h_ref * jax.nn.sigmoid(h_ref)) @ w2 + x @ w3

    xb = x.astype(jnp.bfloat16).astype(jnp.float32)
    w1b = w1.astype(jnp.bfloat16).astype(jnp.float32)
    w2b = w2.astype(jnp.bfloat16).astype(jnp.float32)
    w3b = w3.astype(jnp.bfloat16).astype(jnp.float32)
    hb = xb @ w1b
    ref_b = (hb * jax.nn.sigmoid(hb)) @ w2b + xb @ w3b

    # 1) Exact f32 compute path; th=256 so the H reduction spans 2 grid steps
    #    and exercises seed / partial-sum / resident-output accumulation.
    out_f32 = feed_forward(x, w1, w2, w3, th=256, compute_dtype=jnp.float32)
    out_f32 = jax.block_until_ready(out_f32)
    assert out_f32.shape == (batch, seq, dim)
    assert jnp.allclose(out_f32, ref, atol=2e-4, rtol=2e-4), \
        float(jnp.max(jnp.abs(out_f32 - ref)))

    # 2) Default bf16 MXU-feed path (f32 accumulation, f32 output).
    out_def = feed_forward(x, w1, w2, w3, th=256)
    out_def = jax.block_until_ready(out_def)
    assert jnp.allclose(out_def, ref_b, atol=5e-2, rtol=5e-2), \
        float(jnp.max(jnp.abs(out_def - ref_b)))

    # 3) bf16 activations end-to-end (bf16 output -> scratch-accumulator path).
    out_bf = feed_forward(x.astype(jnp.bfloat16), w1, w2, w3, th=256)
    out_bf = jax.block_until_ready(out_bf)
    assert out_bf.dtype == jnp.bfloat16
    assert jnp.allclose(out_bf.astype(jnp.float32), ref_b,
                        atol=8e-2, rtol=8e-2), \
        float(jnp.max(jnp.abs(out_bf.astype(jnp.float32) - ref_b)))

    print("KERNEL_OK")
</pallas_src>

<mosaic_0001>
module attributes {stable_mosaic.version = 11 : i64} {
  func.func @_ffn_kernel_accum_out(%arg0: i32, %arg1: i32, %arg2: memref<16x128xf32, #tpu.memory_space<vmem>>, %arg3: memref<128x256xf32, #tpu.memory_space<vmem>>, %arg4: memref<256x128xf32, #tpu.memory_space<vmem>>, %arg5: memref<16x128xf32, #tpu.memory_space<vmem>>, %arg6: memref<16x128xf32, #tpu.memory_space<vmem>>) attributes {dimension_semantics = [#tpu.dimension_semantics<parallel>, #tpu.dimension_semantics<arbitrary>], iteration_bounds = array<i64: 1, 2>, scalar_prefetch = 0 : i64, scratch_operands = 0 : i64, tpu.core_type = #tpu.core_type<tc>, window_params = [{transform_indices = @transform_0, window_bounds = array<i64: 16, 128>}, {transform_indices = @transform_1, window_bounds = array<i64: 128, 256>}, {transform_indices = @transform_2, window_bounds = array<i64: 256, 128>}, {transform_indices = @transform_3, window_bounds = array<i64: 16, 128>}, {transform_indices = @transform_4, window_bounds = array<i64: 16, 128>}]} {
    %c0_i32 = arith.constant 0 : i32
    %0 = arith.cmpi eq, %arg1, %c0_i32 : i32
    %1 = arith.extui %0 : i1 to i32
    %c0_i32_0 = arith.constant 0 : i32
    %2 = arith.cmpi ne, %1, %c0_i32_0 : i32
    scf.if %2 {
      %c0_12 = arith.constant 0 : index
      %c0_13 = arith.constant 0 : index
      %17 = vector.load %arg5[%c0_12, %c0_13] : memref<16x128xf32, #tpu.memory_space<vmem>>, vector<16x128xf32>
      %c0_14 = arith.constant 0 : index
      %c0_15 = arith.constant 0 : index
      %18 = vector.load %arg6[%c0_14, %c0_15] : memref<16x128xf32, #tpu.memory_space<vmem>>, vector<16x128xf32>
      tpu.vector_store %arg6[%c0_14, %c0_15], %17 {strides = array<i32>} : memref<16x128xf32, #tpu.memory_space<vmem>>, vector<16x128xf32>,
    } else {
    }
    %c0 = arith.constant 0 : index
    %c0_1 = arith.constant 0 : index
    %3 = vector.load %arg2[%c0, %c0_1] : memref<16x128xf32, #tpu.memory_space<vmem>>, vector<16x128xf32>
    %c0_2 = arith.constant 0 : index
    %c0_3 = arith.constant 0 : index
    %4 = vector.load %arg3[%c0_2, %c0_3] : memref<128x256xf32, #tpu.memory_space<vmem>>, vector<128x256xf32>
    %cst = arith.constant dense<0.000000e+00> : vector<16x256xf32>
    %5 = tpu.matmul %3, %4, %cst {dimension_numbers = #tpu.dot_dimension_numbers<[1], [0], [0], [1], [0, 0, 1, 1], [], []>} : vector<16x128xf32>, vector<128x256xf32>, vector<16x256xf32> -> vector<16x256xf32>
    %6 = arith.negf %5 : vector<16x256xf32>
    %7 = math.exp %6 : vector<16x256xf32>
    %cst_4 = arith.constant 1.000000e+00 : f32
    %8 = vector.broadcast %cst_4 : f32 to vector<16x256xf32>
    %9 = arith.addf %8, %7 : vector<16x256xf32>
    %10 = arith.divf %8, %9 : vector<16x256xf32>
    %11 = arith.mulf %5, %10 : vector<16x256xf32>
    %c0_5 = arith.constant 0 : index
    %c0_6 = arith.constant 0 : index
    %12 = vector.load %arg6[%c0_5, %c0_6] : memref<16x128xf32, #tpu.memory_space<vmem>>, vector<16x128xf32>
    %c0_7 = arith.constant 0 : index
    %c0_8 = arith.constant 0 : index
    %13 = vector.load %arg4[%c0_7, %c0_8] : memref<256x128xf32, #tpu.memory_space<vmem>>, vector<256x128xf32>
    %cst_9 = arith.constant dense<0.000000e+00> : vector<16x128xf32>
    %14 = tpu.matmul %11, %13, %cst_9 {dimension_numbers = #tpu.dot_dimension_numbers<[1], [0], [0], [1], [0, 0, 1, 1], [], []>} : vector<16x256xf32>, vector<256x128xf32>, vector<16x128xf32> -> vector<16x128xf32>
    %15 = arith.addf %12, %14 : vector<16x128xf32>
    %c0_10 = arith.constant 0 : index
    %c0_11 = arith.constant 0 : index
    %16 = vector.load %arg6[%c0_10, %c0_11] : memref<16x128xf32, #tpu.memory_space<vmem>>, vector<16x128xf32>
    tpu.vector_store %arg6[%c0_10, %c0_11], %15 {strides = array<i32>} : memref<16x128xf32, #tpu.memory_space<vmem>>, vector<16x128xf32>,
    return
  }
  func.func @transform_0(%arg0: i32, %arg1: i32) -> (i32, i32) {
    %c0_i32 = arith.constant 0 : i32
    %c0_i32_0 = arith.constant 0 : i32
    return %arg0, %c0_i32 : i32, i32
  }
  func.func @transform_1(%arg0: i32, %arg1: i32) -> (i32, i32) {
    %c0_i32 = arith.constant 0 : i32
    %c0_i32_0 = arith.constant 0 : i32
    return %c0_i32, %arg1 : i32, i32
  }
  func.func @transform_2(%arg0: i32, %arg1: i32) -> (i32, i32) {
    %c0_i32 = arith.constant 0 : i32
    %c0_i32_0 = arith.constant 0 : i32
    return %arg1, %c0_i32 : i32, i32
  }
  func.func @transform_3(%arg0: i32, %arg1: i32) -> (i32, i32) {
    %c0_i32 = arith.constant 0 : i32
    %c0_i32_0 = arith.constant 0 : i32
    return %arg0, %c0_i32 : i32, i32
  }
  func.func @transform_4(%arg0: i32, %arg1: i32) -> (i32, i32) {
    %c0_i32 = arith.constant 0 : i32
    %c0_i32_0 = arith.constant 0 : i32
    return %arg0, %c0_i32 : i32, i32
  }
}

</mosaic_0001>

<llo_original>
// kernel: tpu_custom_call.1
$region0: #{tpu_custom_call.1}
  #allocation0 [shape = 'u32[]', space=smem, size = 0x4, offset = 0x4, fixed_abs, tag = 'smem constant byte address 0x4 - core index']
  #allocation1 [shape = 'u32[144,128]{1,0:T(1,128)}', space=vmem, size = 0x12000, scoped, tag = 'internal scratch']
  %s0 = inlined_call_operand.hbm [shape: f32[16,128], index: 0, kind: input, shape index: {}]
  %s1 = inlined_call_operand.hbm [shape: f32[128,512], index: 1, kind: input, shape index: {}]
  %s2 = inlined_call_operand.hbm [shape: f32[512,128], index: 2, kind: input, shape index: {}]
  %s3 = inlined_call_operand.hbm [shape: f32[16,128], index: 3, kind: input, shape index: {}]
  %s4 = inlined_call_operand.hbm [shape: f32[16,128], index: 4, kind: output, shape index: {}]
  %s5 = sld [smem:[#allocation0]]
  $region69: #{tpu_custom_call.1} parent=0
    _
  %s7 = ssub.s32 1, %s5
  %s8 = scalar_select 0, %s7, %s5
  $region1: #{tpu_custom_call.1} parent=0
    #allocation2 [shape = 'u8[8192]{0}', space=vmem, size = 0x2000, scoped, tag = 'input window, operand 0, single buffered']
    #allocation3 [shape = 's32[2]{0}', space=sflag, size = 0x8, scoped, tag = 'scoped memory for tpu_custom_call.1']
    #allocation4 [shape = 's32[2]{0}', space=sflag, size = 0x8, scoped, tag = 'scoped memory for tpu_custom_call.1']
    #allocation5 [shape = 'u8[262144]{0}', space=vmem, size = 0x40000, scoped, tag = 'input window, operand 1']
    #allocation6 [shape = 's32[2]{0}', space=sflag, size = 0x8, scoped, tag = 'scoped memory for tpu_custom_call.1']
    #allocation7 [shape = 'u8[262144]{0}', space=vmem, size = 0x40000, scoped, tag = 'input window, operand 2']
    #allocation8 [shape = 'u8[8192]{0}', space=vmem, size = 0x2000, scoped, tag = 'input window, operand 3, single buffered']
    #allocation9 [shape = 's32[1]{0}', space=sflag, size = 0x4, scoped, tag = 'scoped memory for tpu_custom_call.1']
    #allocation10 [shape = 'u8[8192]{0}', space=vmem, size = 0x2000, scoped, tag = 'output window, operand 0, single buffered']
    %9 = vsyncpa [#allocation3], 0
    %10 = vsyncpa [#allocation6], 0
    %s11 = scalar_lea.sflag [#allocation6], 1
    %12 = vsyncpa %s11, 0
    %13 = vsyncpa [#allocation9], 0
    %14 = vsyncpa [#allocation4], 0
    loop: start=0, step=1, limit=4
    $region2: #{tpu_custom_call.1} parent=1 // loop_pre_header
      _
    $region3: #{tpu_custom_call.1} parent=1 // loop_header
      %s16 = sphi 0, %s20
      %p17 = scmp.ge.s32.totalorder %s16, 4
      %s23 = sphi 0, %s35
      %s24 = sphi 0, %s31
      %s25 = sphi 0, %s23
      %s26 = sphi 0, %s24
      %s27 = sphi 0, %s25
      %s28 = sphi 0, %s26
      %s38 = sphi 0, %s40
      %s41 = sphi 0, %s38
      %s42 = sphi 0, %s41
      %s58 = sphi 0, %s42
      %s64 = sphi 0, %s66
      %s67 = sphi 0, %s64
      %s68 = sphi 0, %s67
      %s84 = sphi 0, %s68
      %s90 = sphi 0, %s92
      %s93 = sphi 0, %s90
      %s94 = sphi 0, %s93
      %s110 = sphi 0, %s94
      %s116 = sphi 0, %s118
      %s119 = sphi 0, %s116
      %s120 = sphi 0, %s119
      %s136 = sphi 0, %s120
      %s142 = sphi 0, %s144
      %s145 = sphi 0, %s142
      %s146 = sphi 0, %s145
      %s162 = sphi 0, %s146
    $region4: #{tpu_custom_call.1} parent=1 // loop_header_branch
      %19 = sbr.rel (%p17) target = $region8
    $region5: #{tpu_custom_call.1} parent=1 // loop_body
      %s21 = ssub.s32 %s16, 1
      %s22 = ssub.s32 %s16, 2
      %s29 = sadd.s32 1, %s24
      %p30 = scmp.ge.s32.totalorder %s29, 2
      %s31 = scalar_select %p30, 0, %s29
      %s32 = sadd.s32 1, %s23
      %s33 = scalar_select %p30, %s32, %s23
      %p34 = scmp.ge.s32.totalorder %s33, 1
      %s35 = scalar_select %p34, 0, %s33
      %s36 = ssub.s32 %s23, %s35
      %p37 = scmp.eq.s32.totalorder %s36, 0
      %s39 = sadd.s32 %s38, 1
      %s40 = scalar_select %p37, %s38, %s39
      %p43 = pneg %p37
      %p44 = scmp.eq.s32.totalorder %s16, 1
      %p45 = por %p43, %p44
      %p46 = scmp.ne.s32.totalorder %s38, %s41
      %p47 = scmp.eq.s32.totalorder %s16, 0
      %p48 = por %p46, %p47
      %p49 = scmp.ne.s32.totalorder %s38, %s41
      %p50 = scmp.eq.s32.totalorder %s21, 1
      %p51 = por %p49, %p50
      %p52 = scmp.ne.s32.totalorder %s41, %s42
      %p53 = scmp.eq.s32.totalorder %s21, 0
      %p54 = por %p52, %p53
      %p55 = scmp.ne.s32.totalorder %s41, %s42
      %p56 = scmp.eq.s32.totalorder %s22, 1
      %p57 = por %p55, %p56
      %p59 = scmp.ne.s32.totalorder %s42, %s58
      %p60 = scmp.eq.s32.totalorder %s22, 0
      %p61 = por %p59, %p60
      %s62 = ssub.s32 %s24, %s31
      %p63 = scmp.eq.s32.totalorder %s62, 0
      %s65 = sadd.s32 %s64, 1
      %s66 = scalar_select %p63, %s64, %s65
      %p69 = pneg %p63
      %p70 = scmp.eq.s32.totalorder %s16, 1
      %p71 = por %p69, %p70
      %p72 = scmp.ne.s32.totalorder %s64, %s67
      %p73 = scmp.eq.s32.totalorder %s16, 0
      %p74 = por %p72, %p73
      %p75 = scmp.ne.s32.totalorder %s64, %s67
      %p76 = scmp.eq.s32.totalorder %s21, 1
      %p77 = por %p75, %p76
      %p78 = scmp.ne.s32.totalorder %s67, %s68
      %p79 = scmp.eq.s32.totalorder %s21, 0
      %p80 = por %p78, %p79
      %p81 = scmp.ne.s32.totalorder %s67, %s68
      %p82 = scmp.eq.s32.totalorder %s22, 1
      %p83 = por %p81, %p82
      %p85 = scmp.ne.s32.totalorder %s68, %s84
      %p86 = scmp.eq.s32.totalorder %s22, 0
      %p87 = por %p85, %p86
      %s88 = ssub.s32 %s24, %s31
      %p89 = scmp.eq.s32.totalorder %s88, 0
      %s91 = sadd.s32 %s90, 1
      %s92 = scalar_select %p89, %s90, %s91
      %p95 = pneg %p89
      %p96 = scmp.eq.s32.totalorder %s16, 1
      %p97 = por %p95, %p96
      %p98 = scmp.ne.s32.totalorder %s90, %s93
      %p99 = scmp.eq.s32.totalorder %s16, 0
      %p100 = por %p98, %p99
      %p101 = scmp.ne.s32.totalorder %s90, %s93
      %p102 = scmp.eq.s32.totalorder %s21, 1
      %p103 = por %p101, %p102
      %p104 = scmp.ne.s32.totalorder %s93, %s94
      %p105 = scmp.eq.s32.totalorder %s21, 0
      %p106 = por %p104, %p105
      %p107 = scmp.ne.s32.totalorder %s93, %s94
      %p108 = scmp.eq.s32.totalorder %s22, 1
      %p109 = por %p107, %p108
      %p111 = scmp.ne.s32.totalorder %s94, %s110
      %p112 = scmp.eq.s32.totalorder %s22, 0
      %p113 = por %p111, %p112
      %s114 = ssub.s32 %s23, %s35
      %p115 = scmp.eq.s32.totalorder %s114, 0
      %s117 = sadd.s32 %s116, 1
      %s118 = scalar_select %p115, %s116, %s117
      %p121 = pneg %p115
      %p122 = scmp.eq.s32.totalorder %s16, 1
      %p123 = por %p121, %p122
      %p124 = scmp.ne.s32.totalorder %s116, %s119
      %p125 = scmp.eq.s32.totalorder %s16, 0
      %p126 = por %p124, %p125
      %p127 = scmp.ne.s32.totalorder %s116, %s119
      %p128 = scmp.eq.s32.totalorder %s21, 1
      %p129 = por %p127, %p128
      %p130 = scmp.ne.s32.totalorder %s119, %s120
      %p131 = scmp.eq.s32.totalorder %s21, 0
      %p132 = por %p130, %p131
      %p133 = scmp.ne.s32.totalorder %s119, %s120
      %p134 = scmp.eq.s32.totalorder %s22, 1
      %p135 = por %p133, %p134
      %p137 = scmp.ne.s32.totalorder %s120, %s136
      %p138 = scmp.eq.s32.totalorder %s22, 0
      %p139 = por %p137, %p138
      %s140 = ssub.s32 %s23, %s35
      %p141 = scmp.eq.s32.totalorder %s140, 0
      %s143 = sadd.s32 %s142, 1
      %s144 = scalar_select %p141, %s142, %s143
      %p147 = pneg %p141
      %p148 = scmp.eq.s32.totalorder %s16, 1
      %p149 = por %p147, %p148
      %p150 = scmp.ne.s32.totalorder %s142, %s145
      %p151 = scmp.eq.s32.totalorder %s16, 0
      %p152 = por %p150, %p151
      %p153 = scmp.ne.s32.totalorder %s142, %s145
      %p154 = scmp.eq.s32.totalorder %s21, 1
      %p155 = por %p153, %p154
      %p156 = scmp.ne.s32.totalorder %s145, %s146
      %p157 = scmp.eq.s32.totalorder %s21, 0
      %p158 = por %p156, %p157
      %p159 = scmp.ne.s32.totalorder %s145, %s146
      %p160 = scmp.eq.s32.totalorder %s22, 1
      %p161 = por %p159, %p160
      %p163 = scmp.ne.s32.totalorder %s146, %s162
      %p164 = scmp.eq.s32.totalorder %s22, 0
      %p165 = por %p163, %p164
      %p166 = scmp.le.s32.totalorder 1, %s16
      %p167 = scmp.lt.s32.totalorder %s16, 3
      %p168 = pnand %p166, %p167
      %p169 = pneg %p168
      // Predicated region
      $region9: #{tpu_custom_call.1} parent=5 // pred_check
        _
      $region10: #{tpu_custom_call.1} parent=5 // pred_check_branch
        %171 = sbr.rel (%p168) target = $region12
      $region11: #{tpu_custom_call.1} parent=5 // pred_region
        %s172 = ssub.s32 %s16, 1
        // Predicated region
        $region13: #{tpu_custom_call.1} parent=11 // pred_check
          %p173 = pneg %p54
        $region14: #{tpu_custom_call.1} parent=11 // pred_check_branch
          %175 = sbr.rel (%p173) target = $region16
        $region15: #{tpu_custom_call.1} parent=11 // pred_region
          %s176 = smul.u32 2, %s25
          %s178 = ssub.s32 256, 256
          %179 = vsyncadd [#allocation3], %s178
          %s180 = smul.addr %s176, 128
          %s181 = scalar_lea.hbm %s0, %s180
          %s182 = sshll.u32 [#allocation2], 4
          %s183 = int_to_ptr.vmem [resolvable:$true] %s182
          %188 = dma.hbm_to_vmem [thread:$0]  %s181, 256, %s183, [#allocation3], 128, 128, 8
        $region16: #{tpu_custom_call.1} parent=11 // pred_fallthru
          _
        // Predicated region
        $region17: #{tpu_custom_call.1} parent=11 // pred_check
          %p189 = pneg %p132
        $region18: #{tpu_custom_call.1} parent=11 // pred_check_branch
          %191 = sbr.rel (%p189) target = $region20
        $region19: #{tpu_custom_call.1} parent=11 // pred_region
          %s192 = smul.u32 2, %s25
          %s194 = ssub.s32 256, 256
          %195 = vsyncadd [#allocation9], %s194
          %s196 = smul.addr %s192, 128
          %s197 = scalar_lea.hbm %s3, %s196
          %s198 = sshll.u32 [#allocation8], 4
          %s199 = int_to_ptr.vmem [resolvable:$true] %s198
          %204 = dma.hbm_to_vmem [thread:$0]  %s197, 256, %s199, [#allocation9], 128, 128, 8
        $region20: #{tpu_custom_call.1} parent=11 // pred_fallthru
          _
      $region12: #{tpu_custom_call.1} parent=5 // pred_fallthru
        _
      %p205 = scmp.lt.s32.totalorder %s16, 2
      // Predicated region
      $region21: #{tpu_custom_call.1} parent=5 // pred_check
        %p206 = pneg %p205
      $region22: #{tpu_custom_call.1} parent=5 // pred_check_branch
        %208 = sbr.rel (%p206) target = $region24
      $region23: #{tpu_custom_call.1} parent=5 // pred_region
        // Predicated region
        $region25: #{tpu_custom_call.1} parent=23 // pred_check
          %p209 = pneg %p74
        $region26: #{tpu_custom_call.1} parent=23 // pred_check_branch
          %211 = sbr.rel (%p209) target = $region28
        $region27: #{tpu_custom_call.1} parent=23 // pred_region
          %s212 = sand.u32 %s16, 1
          %s213 = scalar_lea.sflag [#allocation6], %s212
          %s214 = sand.u32 %s64, 1
          %s215 = smul.addr %s214, 256
          %s216 = scalar_lea.vmem [#allocation5], %s215
          %s217 = smul.u32 2, %s24
          %s219 = ssub.s32 4096, 4096
          %220 = vsyncadd %s213, %s219
          %s221 = smul.addr %s217, 128
          %s222 = scalar_lea.hbm %s1, %s221
          %s223 = sshll.u32 %s216, 4
          %s224 = int_to_ptr.vmem [resolvable:$true] %s223
          %229 = dma.hbm_to_vmem [thread:$0]  %s222, 4096, %s224, %s213, 512, 256, 16
        $region28: #{tpu_custom_call.1} parent=23 // pred_fallthru
          _
        // Predicated region
        $region29: #{tpu_custom_call.1} parent=23 // pred_check
          %p230 = pneg %p100
        $region30: #{tpu_custom_call.1} parent=23 // pred_check_branch
          %232 = sbr.rel (%p230) target = $region32
        $region31: #{tpu_custom_call.1} parent=23 // pred_region
          %s233 = sand.u32 %s16, 1
          %s234 = scalar_lea.sflag [#allocation6], %s233
          %s235 = sand.u32 %s90, 1
          %s236 = smul.addr %s235, 256
          %s237 = scalar_lea.vmem [#allocation7], %s236
          %s238 = smul.u32 32, %s24
          %s240 = ssub.s32 4096, 4096
          %241 = vsyncadd %s234, %s240
          %s242 = smul.addr %s238, 128
          %s243 = scalar_lea.hbm %s2, %s242
          %s244 = sshll.u32 %s237, 4
          %s245 = int_to_ptr.vmem [resolvable:$true] %s244
          %250 = dma.hbm_to_vmem [thread:$0]  %s243, 4096, %s245, %s234, 128, 128, 8
        $region32: #{tpu_custom_call.1} parent=23 // pred_fallthru
          _
      $region24: #{tpu_custom_call.1} parent=5 // pred_fallthru
        _
      %p251 = scmp.le.s32.totalorder 1, %s16
      %p252 = scmp.lt.s32.totalorder %s16, 3
      %p253 = pnand %p251, %p252
      %p254 = pneg %p253
      // Predicated region
      $region33: #{tpu_custom_call.1} parent=5 // pred_check
        _
      $region34: #{tpu_custom_call.1} parent=5 // pred_check_branch
        %256 = sbr.rel (%p253) target = $region36
      $region35: #{tpu_custom_call.1} parent=5 // pred_region
        %s257 = ssub.s32 %s16, 1
        // Predicated region
        $region37: #{tpu_custom_call.1} parent=35 // pred_check
          %p258 = pneg %p54
        $region38: #{tpu_custom_call.1} parent=35 // pred_check_branch
          %260 = sbr.rel (%p258) target = $region40
        $region39: #{tpu_custom_call.1} parent=35 // pred_region
          %261 = dma.done [#allocation3], 256
        $region40: #{tpu_custom_call.1} parent=35 // pred_fallthru
          _
        %s262 = sand.u32 %s21, 1
        %s263 = scalar_lea.sflag [#allocation6], %s262
        %s264 = sand.u32 %s67, 1
        %s265 = smul.addr %s264, 256
        %s266 = scalar_lea.vmem [#allocation5], %s265
        // Predicated region
        $region41: #{tpu_custom_call.1} parent=35 // pred_check
          %p267 = pneg %p80
        $region42: #{tpu_custom_call.1} parent=35 // pred_check_branch
          %269 = sbr.rel (%p267) target = $region44
        $region43: #{tpu_custom_call.1} parent=35 // pred_region
          %270 = dma.done %s263, 4096
        $region44: #{tpu_custom_call.1} parent=35 // pred_fallthru
          _
        %s271 = sand.u32 %s21, 1
        %s272 = scalar_lea.sflag [#allocation6], %s271
        %s273 = sand.u32 %s93, 1
        %s274 = smul.addr %s273, 256
        %s275 = scalar_lea.vmem [#allocation7], %s274
        // Predicated region
        $region45: #{tpu_custom_call.1} parent=35 // pred_check
          %p276 = pneg %p106
        $region46: #{tpu_custom_call.1} parent=35 // pred_check_branch
          %278 = sbr.rel (%p276) target = $region48
        $region47: #{tpu_custom_call.1} parent=35 // pred_region
          %279 = dma.done %s272, 4096
        $region48: #{tpu_custom_call.1} parent=35 // pred_fallthru
          _
        // Predicated region
        $region49: #{tpu_custom_call.1} parent=35 // pred_check
          %p280 = pneg %p132
        $region50: #{tpu_custom_call.1} parent=35 // pred_check_branch
          %282 = sbr.rel (%p280) target = $region52
        $region51: #{tpu_custom_call.1} parent=35 // pred_region
          %283 = dma.done [#allocation9], 256
        $region52: #{tpu_custom_call.1} parent=35 // pred_fallthru
          _
        %p284 = pneg %p54
        %p285 = pneg %p51
        %s286 = sand.u32 %s21, 1
        %s287 = scalar_lea.sflag [#allocation6], %s286
        %s288 = sand.u32 %s67, 1
        %s289 = smul.addr %s288, 256
        %s290 = scalar_lea.vmem [#allocation5], %s289
        %p291 = pneg %p80
        %p292 = pneg %p77
        %s293 = sand.u32 %s21, 1
        %s294 = scalar_lea.sflag [#allocation6], %s293
        %s295 = sand.u32 %s93, 1
        %s296 = smul.addr %s295, 256
        %s297 = scalar_lea.vmem [#allocation7], %s296
        %p298 = pneg %p106
        %p299 = pneg %p103
        %p300 = pneg %p132
        %p301 = pneg %p129
        %p302 = pneg %p158
        %p303 = pneg %p155
        %s304 = smul.u32 2, %s25
        %s305 = smul.u32 2, %s26
        %s306 = smul.u32 32, %s26
        %s307 = smul.u32 2, %s25
        %s308 = smul.u32 2, %s25
        %p309 = scmp.eq.s32.totalorder %s26, 0
        // Predicated region
        $region53: #{tpu_custom_call.1} parent=35 // pred_check
          %p310 = pneg %p309
        $region54: #{tpu_custom_call.1} parent=35 // pred_check_branch
          %312 = sbr.rel (%p310) target = $region56
        $region55: #{tpu_custom_call.1} parent=35 // pred_region
          %v313 = vld [vmem:[#allocation8] sm:$0xff]
          %v314 = vld [vmem:[#allocation8 + $0x8] sm:$0xff]
          %315 = vst [vmem:[#allocation10] sm:$0xff] %v313
          %316 = vst [vmem:[#allocation10 + $0x8] sm:$0xff] %v314
        $region56: #{tpu_custom_call.1} parent=35 // pred_fallthru
          _
        %v317 = vld [vmem:[#allocation2] sm:$0xff]
        %v318 = vld [vmem:[#allocation2 + $0x8] sm:$0xff]
        %v319 = vld [vmem:[%s266] sm:$0xff]
        %v320 = vld [vmem:[%s266 + $0x8] sm:$0xff]
        %v321 = vld [vmem:[%s266 + $0x10] sm:$0xff]
        %v322 = vld [vmem:[%s266 + $0x18] sm:$0xff]
        %v323 = vld [vmem:[%s266 + $0x20] sm:$0xff]
        %v324 = vld [vmem:[%s266 + $0x28] sm:$0xff]
        %v325 = vld [vmem:[%s266 + $0x30] sm:$0xff]
        %v326 = vld [vmem:[%s266 + $0x38] sm:$0xff]
        %v327 = vld [vmem:[%s266 + $0x40] sm:$0xff]
        %v328 = vld [vmem:[%s266 + $0x48] sm:$0xff]
        %v329 = vld [vmem:[%s266 + $0x50] sm:$0xff]
        %v330 = vld [vmem:[%s266 + $0x58] sm:$0xff]
        %v331 = vld [vmem:[%s266 + $0x60] sm:$0xff]
        %v332 = vld [vmem:[%s266 + $0x68] sm:$0xff]
        %v333 = vld [vmem:[%s266 + $0x70] sm:$0xff]
        %v334 = vld [vmem:[%s266 + $0x78] sm:$0xff]
        %v335 = vld [vmem:[%s266 + $0x80] sm:$0xff]
        %v336 = vld [vmem:[%s266 + $0x88] sm:$0xff]
        %v337 = vld [vmem:[%s266 + $0x90] sm:$0xff]
        %v338 = vld [vmem:[%s266 + $0x98] sm:$0xff]
        %v339 = vld [vmem:[%s266 + $0xa0] sm:$0xff]
        %v340 = vld [vmem:[%s266 + $0xa8] sm:$0xff]
        %v341 = vld [vmem:[%s266 + $0xb0] sm:$0xff]
        %v342 = vld [vmem:[%s266 + $0xb8] sm:$0xff]
        %v343 = vld [vmem:[%s266 + $0xc0] sm:$0xff]
        %v344 = vld [vmem:[%s266 + $0xc8] sm:$0xff]
        %v345 = vld [vmem:[%s266 + $0xd0] sm:$0xff]
        %v346 = vld [vmem:[%s266 + $0xd8] sm:$0xff]
        %v347 = vld [vmem:[%s266 + $0xe0] sm:$0xff]
        %v348 = vld [vmem:[%s266 + $0xe8] sm:$0xff]
        %v349 = vld [vmem:[%s266 + $0xf0] sm:$0xff]
        %v350 = vld [vmem:[%s266 + $0xf8] sm:$0xff]
        %351 = vmatprep.subr.mxu0 %v320
        %352 = vmatpush1.msra.mxu0 %v319
        %353 = vmatprep.subr.mxu0 %v322
        %354 = vmatpush1.msra.mxu0 %v321
        %355 = vmatprep.subr.mxu0 %v324
        %356 = vmatpush1.msra.mxu0 %v323
        %357 = vmatprep.subr.mxu0 %v326
        %358 = vmatpush1.msra.mxu0 %v325
        %359 = vmatprep.subr.mxu0 %v328
        %360 = vmatpush1.msra.mxu0 %v327
        %361 = vmatprep.subr.mxu0 %v330
        %362 = vmatpush1.msra.mxu0 %v329
        %363 = vmatprep.subr.mxu0 %v332
        %364 = vmatpush1.msra.mxu0 %v331
        %365 = vmatprep.subr.mxu0 %v334
        %366 = vmatpush1.msra.mxu0 %v333
        %367 = vmatprep.subr.mxu0 %v336
        %368 = vmatpush1.msra.mxu0 %v335
        %369 = vmatprep.subr.mxu0 %v338
        %370 = vmatpush1.msra.mxu0 %v337
        %371 = vmatprep.subr.mxu0 %v340
        %372 = vmatpush1.msra.mxu0 %v339
        %373 = vmatprep.subr.mxu0 %v342
        %374 = vmatpush1.msra.mxu0 %v341
        %375 = vmatprep.subr.mxu0 %v344
        %376 = vmatpush1.msra.mxu0 %v343
        %377 = vmatprep.subr.mxu0 %v346
        %378 = vmatpush1.msra.mxu0 %v345
        %379 = vmatprep.subr.mxu0 %v348
        %380 = vmatpush1.msra.mxu0 %v347
        %381 = vmatprep.subr.mxu0 %v350
        %382 = vmatpush1.msra.mxu0 %v349
        %383 = vmatprep.subr.mxu0 0.0
        %384 = vmatpush1.msra.mxu0 0.0
        %385 = vmatprep.subr.mxu0 0.0
        %386 = vmatpush1.msra.mxu0 0.0
        %387 = vmatprep.subr.mxu0 0.0
        %388 = vmatpush1.msra.mxu0 0.0
        %389 = vmatprep.subr.mxu0 0.0
        %390 = vmatpush1.msra.mxu0 0.0
        %391 = vmatprep.subr.mxu0 0.0
        %392 = vmatpush1.msra.mxu0 0.0
        %393 = vmatprep.subr.mxu0 0.0
        %394 = vmatpush1.msra.mxu0 0.0
        %395 = vmatprep.subr.mxu0 0.0
        %396 = vmatpush1.msra.mxu0 0.0
        %397 = vmatprep.subr.mxu0 0.0
        %398 = vmatpush1.msra.mxu0 0.0
        %399 = vmatprep.subr.mxu0 0.0
        %400 = vmatpush1.msra.mxu0 0.0
        %401 = vmatprep.subr.mxu0 0.0
        %402 = vmatpush1.msra.mxu0 0.0
        %403 = vmatprep.subr.mxu0 0.0
        %404 = vmatpush1.msra.mxu0 0.0
        %405 = vmatprep.subr.mxu0 0.0
        %406 = vmatpush1.msra.mxu0 0.0
        %407 = vmatprep.subr.mxu0 0.0
        %408 = vmatpush1.msra.mxu0 0.0
        %409 = vmatprep.subr.mxu0 0.0
        %410 = vmatpush1.msra.mxu0 0.0
        %411 = vmatprep.subr.mxu0 0.0
        %412 = vmatpush1.msra.mxu0 0.0
        %413 = vmatprep.subr.mxu0 0.0
        %414 = vmatpush1.msra.mxu0 0.0
        %415 = vmatprep.mubr.f32.mxu0 0.0
        %416 = vmatmul.mubr.f32.gmra.mrb[0].mxu0 %v317
        %v417 = vpop.f32.mrb[0].mxu0
        %v418 = vadd.f32 0.0, %v417
        %v419 = vpop.f32.mrb[0].mxu0
        %v420 = vadd.f32 0.0, %v419
        %421 = vmatprep.mubr.f32.mxu0 0.0
        %422 = vmatmul.mubr.f32.gmra.mrb[0].mxu0 %v318
        %v423 = vpop.f32.mrb[0].mxu0
        %v424 = vadd.f32 0.0, %v423
        %v425 = vpop.f32.mrb[0].mxu0
        %v426 = vadd.f32 0.0, %v425
        %427 = vdwg.mxu0
        %v428 = vxor.u32 %v418, 2147483648
        %v429 = vxor.u32 %v420, 2147483648
        %v430 = vxor.u32 %v424, 2147483648
        %v431 = vxor.u32 %v426, 2147483648
        %v432 = vmul.f32 %v428, 1.442695
        %v433 = vpow.pop %v432
        %v434 = vmul.f32 %v429, 1.442695
        %v435 = vpow.pop %v434
        %v436 = vmul.f32 %v430, 1.442695
        %v437 = vpow.pop %v436
        %v438 = vmul.f32 %v431, 1.442695
        %v439 = vpow.pop %v438
        %v440 = vadd.f32 %v433, 1.0
        %v441 = vadd.f32 %v435, 1.0
        %v442 = vadd.f32 %v437, 1.0
        %v443 = vadd.f32 %v439, 1.0
        %v444 = vrcp.pop %v440
        %v445 = vmul.f32 1.0, %v444
        %v446 = vrcp.pop %v441
        %v447 = vmul.f32 1.0, %v446
        %v448 = vrcp.pop %v442
        %v449 = vmul.f32 1.0, %v448
        %v450 = vrcp.pop %v443
        %v451 = vmul.f32 1.0, %v450
        %v452 = vmul.f32 %v418, %v445
        %v453 = vmul.f32 %v420, %v447
        %v454 = vmul.f32 %v424, %v449
        %v455 = vmul.f32 %v426, %v451
        %v456 = vld [vmem:[#allocation10] sm:$0xff]
        %v457 = vld [vmem:[#allocation10 + $0x8] sm:$0xff]
        %v458 = vld [vmem:[%s275] sm:$0xff]
        %v459 = vld [vmem:[%s275 + $0x8] sm:$0xff]
        %v460 = vld [vmem:[%s275 + $0x10] sm:$0xff]
        %v461 = vld [vmem:[%s275 + $0x18] sm:$0xff]
        %v462 = vld [vmem:[%s275 + $0x20] sm:$0xff]
        %v463 = vld [vmem:[%s275 + $0x28] sm:$0xff]
        %v464 = vld [vmem:[%s275 + $0x30] sm:$0xff]
        %v465 = vld [vmem:[%s275 + $0x38] sm:$0xff]
        %v466 = vld [vmem:[%s275 + $0x40] sm:$0xff]
        %v467 = vld [vmem:[%s275 + $0x48] sm:$0xff]
        %v468 = vld [vmem:[%s275 + $0x50] sm:$0xff]
        %v469 = vld [vmem:[%s275 + $0x58] sm:$0xff]
        %v470 = vld [vmem:[%s275 + $0x60] sm:$0xff]
        %v471 = vld [vmem:[%s275 + $0x68] sm:$0xff]
        %v472 = vld [vmem:[%s275 + $0x70] sm:$0xff]
        %v473 = vld [vmem:[%s275 + $0x78] sm:$0xff]
        %v474 = vld [vmem:[%s275 + $0x80] sm:$0xff]
        %v475 = vld [vmem:[%s275 + $0x88] sm:$0xff]
        %v476 = vld [vmem:[%s275 + $0x90] sm:$0xff]
        %v477 = vld [vmem:[%s275 + $0x98] sm:$0xff]
        %v478 = vld [vmem:[%s275 + $0xa0] sm:$0xff]
        %v479 = vld [vmem:[%s275 + $0xa8] sm:$0xff]
        %v480 = vld [vmem:[%s275 + $0xb0] sm:$0xff]
        %v481 = vld [vmem:[%s275 + $0xb8] sm:$0xff]
        %v482 = vld [vmem:[%s275 + $0xc0] sm:$0xff]
        %v483 = vld [vmem:[%s275 + $0xc8] sm:$0xff]
        %v484 = vld [vmem:[%s275 + $0xd0] sm:$0xff]
        %v485 = vld [vmem:[%s275 + $0xd8] sm:$0xff]
        %v486 = vld [vmem:[%s275 + $0xe0] sm:$0xff]
        %v487 = vld [vmem:[%s275 + $0xe8] sm:$0xff]
        %v488 = vld [vmem:[%s275 + $0xf0] sm:$0xff]
        %v489 = vld [vmem:[%s275 + $0xf8] sm:$0xff]
        %490 = vmatprep.subr.mxu0 0.0
        %491 = vmatpush1.msra.mxu0 %v458
        %492 = vmatprep.subr.mxu0 0.0
        %493 = vmatpush1.msra.mxu0 %v459
        %494 = vmatprep.subr.mxu0 0.0
        %495 = vmatpush1.msra.mxu0 %v460
        %496 = vmatprep.subr.mxu0 0.0
        %497 = vmatpush1.msra.mxu0 %v461
        %498 = vmatprep.subr.mxu0 0.0
        %499 = vmatpush1.msra.mxu0 %v462
        %500 = vmatprep.subr.mxu0 0.0
        %501 = vmatpush1.msra.mxu0 %v463
        %502 = vmatprep.subr.mxu0 0.0
        %503 = vmatpush1.msra.mxu0 %v464
        %504 = vmatprep.subr.mxu0 0.0
        %505 = vmatpush1.msra.mxu0 %v465
        %506 = vmatprep.subr.mxu0 0.0
        %507 = vmatpush1.msra.mxu0 %v466
        %508 = vmatprep.subr.mxu0 0.0
        %509 = vmatpush1.msra.mxu0 %v467
        %510 = vmatprep.subr.mxu0 0.0
        %511 = vmatpush1.msra.mxu0 %v468
        %512 = vmatprep.subr.mxu0 0.0
        %513 = vmatpush1.msra.mxu0 %v469
        %514 = vmatprep.subr.mxu0 0.0
        %515 = vmatpush1.msra.mxu0 %v470
        %516 = vmatprep.subr.mxu0 0.0
        %517 = vmatpush1.msra.mxu0 %v471
        %518 = vmatprep.subr.mxu0 0.0
        %519 = vmatpush1.msra.mxu0 %v472
        %520 = vmatprep.subr.mxu0 0.0
        %521 = vmatpush1.msra.mxu0 %v473
        %522 = vmatprep.subr.mxu0 0.0
        %523 = vmatpush1.msra.mxu0 %v474
        %524 = vmatprep.subr.mxu0 0.0
        %525 = vmatpush1.msra.mxu0 %v475
        %526 = vmatprep.subr.mxu0 0.0
        %527 = vmatpush1.msra.mxu0 %v476
        %528 = vmatprep.subr.mxu0 0.0
        %529 = vmatpush1.msra.mxu0 %v477
        %530 = vmatprep.subr.mxu0 0.0
        %531 = vmatpush1.msra.mxu0 %v478
        %532 = vmatprep.subr.mxu0 0.0
        %533 = vmatpush1.msra.mxu0 %v479
        %534 = vmatprep.subr.mxu0 0.0
        %535 = vmatpush1.msra.mxu0 %v480
        %536 = vmatprep.subr.mxu0 0.0
        %537 = vmatpush1.msra.mxu0 %v481
        %538 = vmatprep.subr.mxu0 0.0
        %539 = vmatpush1.msra.mxu0 %v482
        %540 = vmatprep.subr.mxu0 0.0
        %541 = vmatpush1.msra.mxu0 %v483
        %542 = vmatprep.subr.mxu0 0.0
        %543 = vmatpush1.msra.mxu0 %v484
        %544 = vmatprep.subr.mxu0 0.0
        %545 = vmatpush1.msra.mxu0 %v485
        %546 = vmatprep.subr.mxu0 0.0
        %547 = vmatpush1.msra.mxu0 %v486
        %548 = vmatprep.subr.mxu0 0.0
        %549 = vmatpush1.msra.mxu0 %v487
        %550 = vmatprep.subr.mxu0 0.0
        %551 = vmatpush1.msra.mxu0 %v488
        %552 = vmatprep.subr.mxu0 0.0
        %553 = vmatpush1.msra.mxu0 %v489
        %554 = vmatprep.mubr.f32.mxu0 %v453
        %555 = vmatmul.mubr.f32.gmra.mrb[0].mxu0 %v452
        %v556 = vpop.f32.mrb[0].mxu0
        %v557 = vadd.f32 0.0, %v556
        %v558 = vpop.f32.mrb[0].mxu0
        %559 = vmatprep.mubr.f32.mxu0 %v455
        %560 = vmatmul.mubr.f32.gmra.mrb[0].mxu0 %v454
        %v561 = vpop.f32.mrb[0].mxu0
        %v562 = vadd.f32 0.0, %v561
        %v563 = vpop.f32.mrb[0].mxu0
        %564 = vdwg.mxu0
        %v565 = vadd.f32 %v456, %v557
        %v566 = vadd.f32 %v457, %v562
        %567 = vst [vmem:[#allocation10] sm:$0xff] %v565
        %568 = vst [vmem:[#allocation10 + $0x8] sm:$0xff] %v566
        // Predicated region
        $region57: #{tpu_custom_call.1} parent=35 // pred_check
          %p569 = pneg %p155
        $region58: #{tpu_custom_call.1} parent=35 // pred_check_branch
          %571 = sbr.rel (%p569) target = $region60
        $region59: #{tpu_custom_call.1} parent=35 // pred_region
          %s572 = smul.u32 2, %s25
          %s574 = ssub.s32 256, 256
          %575 = vsyncadd [#allocation4], %s574
          %s576 = smul.addr %s572, 128
          %s577 = scalar_lea.hbm %s4, %s576
          %s578 = sshll.u32 [#allocation10], 4
          %s579 = int_to_ptr.vmem [resolvable:$true] %s578
          %584 = dma.vmem_to_hbm [thread:$0]  %s579, 256, %s577, [#allocation4], 128, 128, 8
        $region60: #{tpu_custom_call.1} parent=35 // pred_fallthru
          _
        // Predicated region
        $region61: #{tpu_custom_call.1} parent=35 // pred_check
          %p585 = pneg %p155
        $region62: #{tpu_custom_call.1} parent=35 // pred_check_branch
          %587 = sbr.rel (%p585) target = $region64
        $region63: #{tpu_custom_call.1} parent=35 // pred_region
          %588 = dma.done [#allocation4], 256
        $region64: #{tpu_custom_call.1} parent=35 // pred_fallthru
          _
      $region36: #{tpu_custom_call.1} parent=5 // pred_fallthru
        _
      %p589 = scmp.le.s32.totalorder 2, %s16
      // Predicated region
      $region65: #{tpu_custom_call.1} parent=5 // pred_check
        %p590 = pneg %p589
      $region66: #{tpu_custom_call.1} parent=5 // pred_check_branch
        %592 = sbr.rel (%p590) target = $region68
      $region67: #{tpu_custom_call.1} parent=5 // pred_region
        %s593 = ssub.s32 %s16, 2
      $region68: #{tpu_custom_call.1} parent=5 // pred_fallthru
        _
    $region6: #{tpu_custom_call.1} parent=1 // loop_footer
      %s20 = sadd.s32 1, %s16
    $region7: #{tpu_custom_call.1} parent=1 // loop_footer_branch
      %15 = sbr.rel target = $region3
    $region8: #{tpu_custom_call.1} parent=1 // loop_exit
      _
    %594 = vsyncpa [#allocation3], 1
    %s595 = scalar_lea.sflag [#allocation3], 1
    %596 = vsyncpa %s595, 1
    %597 = vsyncpa [#allocation6], 1
    %s598 = scalar_lea.sflag [#allocation6], 1
    %599 = vsyncpa %s598, 1
    %600 = vsyncpa [#allocation9], 1
    %601 = vsyncpa [#allocation4], 1
    %s602 = scalar_lea.sflag [#allocation4], 1
    %603 = vsyncpa %s602, 1

</llo_original>
